<compile_context>
chip_gen: v5e
topology: v5e:2x2
jax: 0.10.0
libtpu: 0.0.40
codegen_flags: <defaults>
</compile_context>

<pallas_src>
import jax
import jax.numpy as jnp
from jax.experimental import pallas as pl
from jax.experimental.pallas import tpu as pltpu


_MAX_TILE_B = 256 * 1024      # keeps double-buffered tiles well under v7x VMEM
_PALLAS_MIN_BATCH = 4096      # below this a fused XLA expression matches the kernel


def ce_argmax_kernel(logits_ref, labels_ref, preds_ref, nll_ref, correct_ref):
    """Per-tile fused log-softmax NLL + first-max argmax + correct flag.

    logits_ref  : [C, TB]  native dtype (bf16/f32); classes on sublanes
    labels_ref  : [1, TB]  int8/int16/int32, widened to int32 in-kernel
    preds_ref   : [1, TB]  int32   argmax over classes (first max, like torch)
    nll_ref     : [1, TB]  float32 per-example cross-entropy
    correct_ref : [1, TB]  int32   (pred == label)
    """
    x = logits_ref[...].astype(jnp.float32)        # single in-kernel upcast (v5e-safe)
    y = labels_ref[...].astype(jnp.int32)          # [1, TB]
    num_classes = x.shape[0]

    cls = jax.lax.broadcasted_iota(jnp.int32, x.shape, 0)       # class idx per sublane

    # --- numerically stable log-sum-exp over the (tiny) class axis ---
    cmax = jnp.max(x, axis=0, keepdims=True)                    # [1, TB]
    lse = jnp.log(jnp.sum(jnp.exp(x - cmax), axis=0, keepdims=True)) + cmax

    # --- gather the true-class logit via one-hot select ---
    onehot = (cls == y)                                          # [C, TB]
    true_logit = jnp.sum(jnp.where(onehot, x, 0.0), axis=0, keepdims=True)

    valid = (y >= 0)              # guards garbage lanes in partial edge tiles
    nll_ref[...] = jnp.where(valid, lse - true_logit, 0.0)       # [1, TB]

    # --- argmax over classes: first (lowest) index achieving the max ---
    is_max = (x == cmax)
    cand = jnp.where(is_max, cls, num_classes)
    preds = jnp.min(cand, axis=0, keepdims=True).astype(jnp.int32)
    preds_ref[...] = preds

    # --- correct flag computed in-kernel (labels already resident in VMEM) ---
    correct_ref[...] = jnp.logical_and(preds == y, valid).astype(jnp.int32)


def _round_up(x, m):
    return ((x + m - 1) // m) * m


def _pick_tile(batch, tile_b):
    """Lane-dense tile selection: multiple of 128, VMEM-capped, v7x-aware."""
    tile_b = max(128, (int(tile_b) // 128) * 128)   # enforce multiple of 128
    tile_b = min(tile_b, _MAX_TILE_B)
    b_round = _round_up(batch, 128)
    tile_b = min(tile_b, b_round)
    # v7x has two TensorCores: once the slab is large enough that per-step
    # overhead is negligible, keep >=2 grid steps so the "parallel" axis can
    # shard across cores (costs one extra ~0.35 us step on single-TC v5e/v6e).
    if b_round >= 4096 and tile_b >= b_round:
        tile_b = _round_up(pl.cdiv(b_round, 2), 128)
    return tile_b


def _reference(logits_cb, labels):
    """Pure-JAX reference: nn.CrossEntropyLoss + torch.max(logit, 1)[1] + corrects."""
    x = logits_cb.astype(jnp.float32)
    logp = jax.nn.log_softmax(x, axis=0)
    lbl = labels.astype(jnp.int32)
    nll = -jnp.take_along_axis(logp, lbl[None, :], axis=0)[0]
    loss = jnp.mean(nll)
    preds = jnp.argmax(x, axis=0).astype(jnp.int32)
    corrects = jnp.sum((preds == lbl).astype(jnp.int32))
    return loss, preds, corrects


def _metrics_jax(logits_cb, labels):
    loss, preds, corrects = _reference(logits_cb, labels)
    accuracy = 100.0 * corrects.astype(jnp.float32) / labels.shape[0]
    return loss, preds, corrects, accuracy


def train_step_metrics(logits_cb, labels, *, tile_b=16384, use_pallas=None):
    """Metrics of NeuralNetwork.train_step from class-major logits.

    logits_cb : [C, B] logits, classes leading.  Emit W·Xᵀ upstream so no
                transpose/pad copy of the logits slab is ever needed here.
    labels    : [B] integer class ids (int8 recommended for minimal HBM read).
    Returns (loss, predictions[B] int32, corrects, accuracy%) matching
    nn.CrossEntropyLoss(logit, y) and the corrects/accuracy in train_step().
    """
    C, B = logits_cb.shape
    if use_pallas is None:
        use_pallas = B >= _PALLAS_MIN_BATCH
    if not use_pallas:
        return _metrics_jax(logits_cb, labels)

    tb = _pick_tile(B, tile_b)
    grid_n = pl.cdiv(B, tb)
    labels2d = labels.reshape(1, B)            # metadata-only reshape, no copy

    preds2d, nll2d, correct2d = pl.pallas_call(
        ce_argmax_kernel,
        out_shape=(
            jax.ShapeDtypeStruct((1, B), jnp.int32),    # predictions
            jax.ShapeDtypeStruct((1, B), jnp.float32),  # per-example NLL
            jax.ShapeDtypeStruct((1, B), jnp.int32),    # correct flags
        ),
        grid=(grid_n,),
        in_specs=[
            pl.BlockSpec((C, tb), lambda i: (0, i)),
            pl.BlockSpec((1, tb), lambda i: (0, i)),
        ],
        out_specs=(
            pl.BlockSpec((1, tb), lambda i: (0, i)),
            pl.BlockSpec((1, tb), lambda i: (0, i)),
            pl.BlockSpec((1, tb), lambda i: (0, i)),
        ),
        compiler_params=pltpu.CompilerParams(
            dimension_semantics=("parallel",)),
    )(logits_cb, labels2d)

    preds = preds2d[0]
    loss = jnp.sum(nll2d) / B                       # global-batch mean
    corrects = jnp.sum(correct2d)
    accuracy = 100.0 * corrects.astype(jnp.float32) / B
    return loss, preds, corrects, accuracy


def train_step_metrics_bc(logits_bc, labels, **kw):
    # Compatibility path for torch-layout [B, C] logits.  Prefer emitting
    # class-major logits upstream: this transpose re-reads and re-writes the
    # whole logits slab through HBM before the kernel runs.
    return train_step_metrics(logits_bc.T, labels, **kw)


if __name__ == "__main__":
    C = 4   # rumor-classification classes

    key = jax.random.PRNGKey(0)
    k1, k2, k3, k4 = jax.random.split(key, 4)

    # --- small batch, f32 logits, single partial tile (kernel path forced) ---
    B1 = 300
    logits1 = jax.random.normal(k1, (C, B1), dtype=jnp.float32)          # class-major
    labels1 = jax.random.randint(k2, (B1,), 0, C, dtype=jnp.int32).astype(jnp.int8)

    loss1, preds1, cor1, acc1 = train_step_metrics(logits1, labels1, use_pallas=True)
    jax.block_until_ready((loss1, preds1, cor1, acc1))

    r_loss1, r_preds1, r_cor1 = _reference(logits1, labels1)
    assert jnp.allclose(loss1, r_loss1, atol=1e-5, rtol=1e-5), (loss1, r_loss1)
    assert jnp.array_equal(preds1, r_preds1)
    assert int(cor1) == int(r_cor1), (cor1, r_cor1)

    # --- larger batch, bf16 logits: auto kernel path, grid_n >= 2 tiles ------
    B2 = 4096
    logits2 = jax.random.normal(k3, (C, B2), dtype=jnp.float32).astype(jnp.bfloat16)
    labels2 = jax.random.randint(k4, (B2,), 0, C, dtype=jnp.int32).astype(jnp.int8)

    loss2, preds2, cor2, acc2 = train_step_metrics(logits2, labels2)
    jax.block_until_ready((loss2, preds2, cor2, acc2))

    r_loss2, r_preds2, r_cor2 = _reference(logits2.astype(jnp.float32), labels2)
    assert jnp.allclose(loss2, r_loss2, atol=1e-5, rtol=1e-5), (loss2, r_loss2)
    assert jnp.array_equal(preds2, r_preds2)
    assert int(cor2) == int(r_cor2), (cor2, r_cor2)

    print("KERNEL_OK")
</pallas_src>

<mosaic_0001>
module attributes {stable_mosaic.version = 11 : i64} {
  func.func @ce_argmax_kernel(%arg0: i32, %arg1: memref<4x384xf32, #tpu.memory_space<vmem>>, %arg2: memref<1x384xi8, #tpu.memory_space<vmem>>, %arg3: memref<1x384xi32, #tpu.memory_space<vmem>>, %arg4: memref<1x384xf32, #tpu.memory_space<vmem>>, %arg5: memref<1x384xi32, #tpu.memory_space<vmem>>) attributes {dimension_semantics = [#tpu.dimension_semantics<parallel>], iteration_bounds = array<i64: 1>, scalar_prefetch = 0 : i64, scratch_operands = 0 : i64, tpu.core_type = #tpu.core_type<tc>, window_params = [{transform_indices = @transform_0, window_bounds = array<i64: 4, 384>}, {transform_indices = @transform_1, window_bounds = array<i64: 1, 384>}, {transform_indices = @transform_2, window_bounds = array<i64: 1, 384>}, {transform_indices = @transform_3, window_bounds = array<i64: 1, 384>}, {transform_indices = @transform_4, window_bounds = array<i64: 1, 384>}]} {
    %c0 = arith.constant 0 : index
    %c0_0 = arith.constant 0 : index
    %0 = vector.load %arg1[%c0, %c0_0] : memref<4x384xf32, #tpu.memory_space<vmem>>, vector<4x384xf32>
    %c0_1 = arith.constant 0 : index
    %c0_2 = arith.constant 0 : index
    %1 = vector.load %arg2[%c0_1, %c0_2] : memref<1x384xi8, #tpu.memory_space<vmem>>, vector<1x384xi8>
    %2 = arith.extsi %1 : vector<1x384xi8> to vector<1x384xi32>
    %3 = tpu.iota {dimensions = array<i32: 0>} : vector<4x384xi32>
    %cst = arith.constant dense<0xFF800000> : vector<384xf32>
    %4 = vector.multi_reduction <maximumf>, %0, %cst [0] : vector<4x384xf32> to vector<384xf32>
    %5 = vector.shape_cast %4 : vector<384xf32> to vector<1x384xf32>
    %6 = vector.broadcast %5 : vector<1x384xf32> to vector<4x384xf32>
    %7 = arith.subf %0, %6 : vector<4x384xf32>
    %8 = math.exp %7 : vector<4x384xf32>
    %cst_3 = arith.constant dense<0.000000e+00> : vector<384xf32>
    %9 = vector.multi_reduction <add>, %8, %cst_3 [0] : vector<4x384xf32> to vector<384xf32>
    %10 = vector.shape_cast %9 : vector<384xf32> to vector<1x384xf32>
    %11 = math.log %10 : vector<1x384xf32>
    %12 = arith.addf %11, %5 : vector<1x384xf32>
    %13 = vector.broadcast %2 : vector<1x384xi32> to vector<4x384xi32>
    %14 = arith.cmpi eq, %3, %13 : vector<4x384xi32>
    %cst_4 = arith.constant 0.000000e+00 : f32
    %15 = vector.broadcast %cst_4 : f32 to vector<4x384xf32>
    %16 = arith.select %14, %0, %15 : vector<4x384xi1>, vector<4x384xf32>
    %cst_5 = arith.constant dense<0.000000e+00> : vector<384xf32>
    %17 = vector.multi_reduction <add>, %16, %cst_5 [0] : vector<4x384xf32> to vector<384xf32>
    %18 = vector.shape_cast %17 : vector<384xf32> to vector<1x384xf32>
    %c0_i32 = arith.constant 0 : i32
    %19 = vector.broadcast %c0_i32 : i32 to vector<1x384xi32>
    %20 = arith.cmpi sge, %2, %19 : vector<1x384xi32>
    %21 = arith.subf %12, %18 : vector<1x384xf32>
    %cst_6 = arith.constant 0.000000e+00 : f32
    %22 = vector.broadcast %cst_6 : f32 to vector<1x384xf32>
    %23 = arith.select %20, %21, %22 : vector<1x384xi1>, vector<1x384xf32>
    %c0_7 = arith.constant 0 : index
    %c0_8 = arith.constant 0 : index
    %24 = vector.load %arg4[%c0_7, %c0_8] : memref<1x384xf32, #tpu.memory_space<vmem>>, vector<1x384xf32>
    tpu.vector_store %arg4[%c0_7, %c0_8], %23 {strides = array<i32>} : memref<1x384xf32, #tpu.memory_space<vmem>>, vector<1x384xf32>,
    %25 = vector.broadcast %5 : vector<1x384xf32> to vector<4x384xf32>
    %26 = arith.cmpf oeq, %0, %25 : vector<4x384xf32>
    %c4_i32 = arith.constant 4 : i32
    %27 = vector.broadcast %c4_i32 : i32 to vector<4x384xi32>
    %28 = arith.select %26, %3, %27 : vector<4x384xi1>, vector<4x384xi32>
    %cst_9 = arith.constant dense<2147483647> : vector<384xi32>
    %29 = vector.multi_reduction <minsi>, %28, %cst_9 [0] : vector<4x384xi32> to vector<384xi32>
    %30 = vector.shape_cast %29 : vector<384xi32> to vector<1x384xi32>
    %c0_10 = arith.constant 0 : index
    %c0_11 = arith.constant 0 : index
    %31 = vector.load %arg3[%c0_10, %c0_11] : memref<1x384xi32, #tpu.memory_space<vmem>>, vector<1x384xi32>
    tpu.vector_store %arg3[%c0_10, %c0_11], %30 {strides = array<i32>} : memref<1x384xi32, #tpu.memory_space<vmem>>, vector<1x384xi32>,
    %32 = arith.cmpi eq, %30, %2 : vector<1x384xi32>
    %33 = arith.andi %32, %20 : vector<1x384xi1>
    %34 = arith.extui %33 : vector<1x384xi1> to vector<1x384xi32>
    %c0_12 = arith.constant 0 : index
    %c0_13 = arith.constant 0 : index
    %35 = vector.load %arg5[%c0_12, %c0_13] : memref<1x384xi32, #tpu.memory_space<vmem>>, vector<1x384xi32>
    tpu.vector_store %arg5[%c0_12, %c0_13], %34 {strides = array<i32>} : memref<1x384xi32, #tpu.memory_space<vmem>>, vector<1x384xi32>,
    return
  }
  func.func @transform_0(%arg0: i32) -> (i32, i32) {
    %c0_i32 = arith.constant 0 : i32
    %c0_i32_0 = arith.constant 0 : i32
    return %c0_i32, %arg0 : i32, i32
  }
  func.func @transform_1(%arg0: i32) -> (i32, i32) {
    %c0_i32 = arith.constant 0 : i32
    %c0_i32_0 = arith.constant 0 : i32
    return %c0_i32, %arg0 : i32, i32
  }
  func.func @transform_2(%arg0: i32) -> (i32, i32) {
    %c0_i32 = arith.constant 0 : i32
    %c0_i32_0 = arith.constant 0 : i32
    return %c0_i32, %arg0 : i32, i32
  }
  func.func @transform_3(%arg0: i32) -> (i32, i32) {
    %c0_i32 = arith.constant 0 : i32
    %c0_i32_0 = arith.constant 0 : i32
    return %c0_i32, %arg0 : i32, i32
  }
  func.func @transform_4(%arg0: i32) -> (i32, i32) {
    %c0_i32 = arith.constant 0 : i32
    %c0_i32_0 = arith.constant 0 : i32
    return %c0_i32, %arg0 : i32, i32
  }
}

</mosaic_0001>

<llo_original>
// kernel: tpu_custom_call.1
$region0: #{tpu_custom_call.1}
  #allocation0 [shape = 'u32[]', space=smem, size = 0x4, offset = 0x4, fixed_abs, tag = 'smem constant byte address 0x4 - core index']
  #allocation1 [shape = 'u32[72,128]{1,0:T(1,128)}', space=vmem, size = 0x9000, scoped, tag = 'internal scratch']
  %s0 = inlined_call_operand.hbm [shape: f32[4,300], index: 0, kind: input, shape index: {}]
  %s1 = inlined_call_operand.hbm [shape: s8[1,300], index: 1, kind: input, shape index: {}]
  %s2 = inlined_call_operand.hbm [shape: s32[1,300], index: 2, kind: output, shape index: {0}]
  %s3 = inlined_call_operand.hbm [shape: f32[1,300], index: 3, kind: output, shape index: {1}]
  %s4 = inlined_call_operand.hbm [shape: s32[1,300], index: 4, kind: output, shape index: {2}]
  %5 = xla_tuple %s2, %s3, %s4
  %s6 = sld [smem:[#allocation0]]
  $region42: #{tpu_custom_call.1} parent=0
    _
  %s8 = ssub.s32 1, %s6
  %s9 = scalar_select 0, %s8, %s6
  $region1: #{tpu_custom_call.1} parent=0
    #allocation2 [shape = 'u8[6144]{0}', space=vmem, size = 0x1800, scoped, tag = 'input window, operand 0, single buffered']
    #allocation3 [shape = 's32[1]{0}', space=sflag, size = 0x4, scoped, tag = 'scoped memory for tpu_custom_call.1']
    #allocation4 [shape = 's32[1]{0}', space=sflag, size = 0x4, scoped, tag = 'scoped memory for tpu_custom_call.1']
    #allocation5 [shape = 'u8[1536]{0}', space=vmem, size = 0x800, scoped, tag = 'input window, operand 1, single buffered']
    #allocation6 [shape = 's32[1]{0}', space=sflag, size = 0x4, scoped, tag = 'scoped memory for tpu_custom_call.1']
    #allocation7 [shape = 'u8[1536]{0}', space=vmem, size = 0x800, scoped, tag = 'output window, operand 0, single buffered']
    #allocation8 [shape = 'u8[1536]{0}', space=vmem, size = 0x800, scoped, tag = 'output window, operand 1, single buffered']
    #allocation9 [shape = 's32[1]{0}', space=sflag, size = 0x4, scoped, tag = 'scoped memory for tpu_custom_call.1']
    #allocation10 [shape = 'u8[1536]{0}', space=vmem, size = 0x800, scoped, tag = 'output window, operand 2, single buffered']
    %10 = vsyncpa [#allocation3], 0
    %11 = vsyncpa [#allocation6], 0
    %12 = vsyncpa [#allocation4], 0
    %13 = vsyncpa [#allocation9], 0
    // Predicated region
    $region2: #{tpu_custom_call.1} parent=1 // pred_check
      _
    $region3: #{tpu_custom_call.1} parent=1 // pred_check_branch
      %15 = sbr.rel (0) target = $region5
    $region4: #{tpu_custom_call.1} parent=1 // pred_region
      %17 = vsyncadd [#allocation3], 0
      %s19 = sshll.u32 %s0, 4
      %s20 = int_to_ptr.hbm [resolvable:$true] %s19
      %s21 = sshll.u32 [#allocation2], 4
      %s22 = int_to_ptr.vmem [resolvable:$true] %s21
      %24 = dma.hbm_to_vmem [thread:$0]  %s20, 192, %s22, [#allocation3]
    $region5: #{tpu_custom_call.1} parent=1 // pred_fallthru
      _
    // Predicated region
    $region6: #{tpu_custom_call.1} parent=1 // pred_check
      _
    $region7: #{tpu_custom_call.1} parent=1 // pred_check_branch
      %26 = sbr.rel (0) target = $region9
    $region8: #{tpu_custom_call.1} parent=1 // pred_region
      %28 = vsyncadd [#allocation6], 0
      %s30 = sshll.u32 %s1, 4
      %s31 = int_to_ptr.hbm [resolvable:$true] %s30
      %s32 = sshll.u32 [#allocation5], 4
      %s33 = int_to_ptr.vmem [resolvable:$true] %s32
      %35 = dma.hbm_to_vmem [thread:$0]  %s31, 48, %s33, [#allocation6]
    $region9: #{tpu_custom_call.1} parent=1 // pred_fallthru
      _
    // Predicated region
    $region10: #{tpu_custom_call.1} parent=1 // pred_check
      _
    $region11: #{tpu_custom_call.1} parent=1 // pred_check_branch
      %37 = sbr.rel (0) target = $region13
    $region12: #{tpu_custom_call.1} parent=1 // pred_region
      %39 = dma.done [#allocation3], 192
    $region13: #{tpu_custom_call.1} parent=1 // pred_fallthru
      _
    // Predicated region
    $region14: #{tpu_custom_call.1} parent=1 // pred_check
      _
    $region15: #{tpu_custom_call.1} parent=1 // pred_check_branch
      %41 = sbr.rel (0) target = $region17
    $region16: #{tpu_custom_call.1} parent=1 // pred_region
      %43 = dma.done [#allocation6], 48
    $region17: #{tpu_custom_call.1} parent=1 // pred_fallthru
      _
    %v44 = vld [vmem:[#allocation2] sm:$0xff]
    %v45 = vld [vmem:[#allocation2 + $0x8] sm:$0xf]
    %v46 = vld [vmem:[#allocation5] sm:$0x7]
    %v47 = vunpack.c.0.s8 %v46
    %v48 = vunpack.c.1.s8 %v46
    %v49 = vlaneseq
    %v50 = vshrl.u32 %v49, 7
    %53 = vst [vmem:[#allocation1] ss:$2 sm:$0xff] %v44
    %s54 = scalar_lea.vmem [#allocation1], 16
    %55 = vst [vmem:[%s54] ss:$2 sm:$0xff] %v45
    %v56 = vld.sshfl [vmem:[#allocation1] sm:$0xff pattern:$0x75316420]
    %v57 = vld.sshfl [vmem:[#allocation1 + $0x8] sm:$0xff pattern:$0x75316420]
    %v58 = vld.sshfl [vmem:[#allocation1 + $0x10] sm:$0xff pattern:$0x75316420]
    %vm62 = vcmask 1043456
    %v63 = vsel %vm62, %v56, -inf
    %v64 = vrot.slane %v63, 4
    %v65 = vmax.f32 %v63, %v64
    %v66 = vrot.slane %v65, 2
    %v67 = vmax.f32 %v65, %v66
    %v68 = vrot.slane %v67, 1
    %v69 = vmax.f32 %v67, %v68
    %v70 = vsel %vm62, %v57, -inf
    %v71 = vrot.slane %v70, 4
    %v72 = vmax.f32 %v70, %v71
    %v73 = vrot.slane %v72, 2
    %v74 = vmax.f32 %v72, %v73
    %v75 = vrot.slane %v74, 1
    %v76 = vmax.f32 %v74, %v75
    %v77 = vsel %vm62, %v58, -inf
    %v78 = vrot.slane %v77, 4
    %v79 = vmax.f32 %v77, %v78
    %v80 = vrot.slane %v79, 2
    %v81 = vmax.f32 %v79, %v80
    %v82 = vrot.slane %v81, 1
    %v83 = vmax.f32 %v81, %v82
    %v86 = vrot.slane %v76, 4
    %v87 = vsel %vm62, %v69, %v86
    %v89 = vsub.f32 %v44, %v87
    %v90 = vsub.f32 %v45, %v83
    %v91 = vmul.f32 %v89, 1.442695
    %v92 = vpow.pop %v91
    %v93 = vmul.f32 %v90, 1.442695
    %v94 = vpow.pop %v93
    %97 = vst [vmem:[#allocation1] ss:$2 sm:$0xff] %v92
    %s98 = scalar_lea.vmem [#allocation1], 16
    %99 = vst [vmem:[%s98] ss:$2 sm:$0xff] %v94
    %v100 = vld.sshfl [vmem:[#allocation1] sm:$0xff pattern:$0x75316420]
    %v101 = vld.sshfl [vmem:[#allocation1 + $0x8] sm:$0xff pattern:$0x75316420]
    %v102 = vld.sshfl [vmem:[#allocation1 + $0x10] sm:$0xff pattern:$0x75316420]
    %v106 = vsel %vm62, %v100, 0.0
    %v107 = vrot.slane %v106, 4
    %v108 = vadd.f32 %v106, %v107
    %v109 = vrot.slane %v108, 2
    %v110 = vadd.f32 %v108, %v109
    %v111 = vrot.slane %v110, 1
    %v112 = vadd.f32 %v110, %v111
    %v113 = vsel %vm62, %v101, 0.0
    %v114 = vrot.slane %v113, 4
    %v115 = vadd.f32 %v113, %v114
    %v116 = vrot.slane %v115, 2
    %v117 = vadd.f32 %v115, %v116
    %v118 = vrot.slane %v117, 1
    %v119 = vadd.f32 %v117, %v118
    %v120 = vsel %vm62, %v102, 0.0
    %v121 = vrot.slane %v120, 4
    %v122 = vadd.f32 %v120, %v121
    %v123 = vrot.slane %v122, 2
    %v124 = vadd.f32 %v122, %v123
    %v125 = vrot.slane %v124, 1
    %v126 = vadd.f32 %v124, %v125
    %v127 = vlog2.pop %v112
    %v128 = vmul.f32 %v127, 0.6931472
    %v129 = vlog2.pop %v119
    %v130 = vmul.f32 %v129, 0.6931472
    %v131 = vlog2.pop %v126
    %v132 = vmul.f32 %v131, 0.6931472
    %v133 = vadd.f32 %v128, %v69
    %v134 = vadd.f32 %v130, %v76
    %v135 = vadd.f32 %v132, %v83
    %v136 = vperm.slane %v47, 0
    %v137 = vperm.slane %v47, 4
    %v138 = vperm.slane %v48, 0
    %v139 = vperm.slane %v136, 0
    %v140 = vperm.slane %v137, 0
    %v141 = vperm.slane %v138, 0
    %vm142 = vcmp.eq.s32.totalorder %v50, %v139
    %vm143 = vcmp.eq.s32.totalorder %v50, %v140
    %vm144 = vcmp.eq.s32.totalorder %v50, %v141
    %145 = vst [vmem:[#allocation1] ss:$2 sm:$0xff] %v44
    %s146 = scalar_lea.vmem [#allocation1], 16
    %147 = vst [vmem:[%s146] ss:$2 sm:$0xff] %v45
    %v148 = vld.sshfl [vmem:[#allocation1] sm:$0xff pattern:$0x75316420]
    %v149 = vld.sshfl [vmem:[#allocation1 + $0x8] sm:$0xff pattern:$0x75316420]
    %v150 = vld.sshfl [vmem:[#allocation1 + $0x10] sm:$0xff pattern:$0x75316420]
    %v154 = vsel %vm142, %v148, 0.0
    %v155 = vsel %vm143, %v149, 0.0
    %v156 = vsel %vm144, %v150, 0.0
    %v157 = vsel %vm62, %v154, 0.0
    %v158 = vrot.slane %v157, 4
    %v159 = vadd.f32 %v157, %v158
    %v160 = vrot.slane %v159, 2
    %v161 = vadd.f32 %v159, %v160
    %v162 = vrot.slane %v161, 1
    %v163 = vadd.f32 %v161, %v162
    %v164 = vsel %vm62, %v155, 0.0
    %v165 = vrot.slane %v164, 4
    %v166 = vadd.f32 %v164, %v165
    %v167 = vrot.slane %v166, 2
    %v168 = vadd.f32 %v166, %v167
    %v169 = vrot.slane %v168, 1
    %v170 = vadd.f32 %v168, %v169
    %v171 = vsel %vm62, %v156, 0.0
    %v172 = vrot.slane %v171, 4
    %v173 = vadd.f32 %v171, %v172
    %v174 = vrot.slane %v173, 2
    %v175 = vadd.f32 %v173, %v174
    %v176 = vrot.slane %v175, 1
    %v177 = vadd.f32 %v175, %v176
    %vm178 = vcmp.ge.s32.totalorder %v47, 0
    %vm179 = vcmp.ge.s32.totalorder %v48, 0
    %v180 = vsub.f32 %v133, %v163
    %v181 = vsub.f32 %v134, %v170
    %v182 = vsub.f32 %v135, %v177
    %v185 = vrot.slane %v181, 4
    %v186 = vsel %vm62, %v180, %v185
    %v188 = vsel %vm178, %v186, 0.0
    %v189 = vsel %vm179, %v182, 0.0
    %v192 = vrot.slane %v188, 3
    %v193 = vrot.slane %v189, 6
    %v194 = vrot.slane %v189, 1
    %vm195 = vcmask 1040384
    %v196 = vsel %vm195, %v188, %v192
    %vm197 = vcmask 1042434
    %v198 = vsel %vm197, %v193, %v194
    %vm199 = vcmask 1041408
    %v200 = vsel %vm199, %v196, %v198
    %v202 = vlaneseq
    %vm203 = vcmp.ge.s32.totalorder %v202, 0
    %vm204 = vcmp.lt.s32.totalorder %v202, 384
    %vm205 = vmand %vm203, %vm204
    %206 = vst.msk [vmem:[#allocation8] sm:$0x7] %vm205, %v200
    %vm207 = vcmp.eq.f32.partialorder %v44, %v87
    %vm208 = vcmp.eq.f32.partialorder %v45, %v83
    %v210 = vunpack.c.l.s4 839922192
    %v211 = vunpack.c.0.s8 %v210
    %v212 = vperm.slane %v50, %v211
    %v213 = vsel %vm207, %v212, 4
    %v214 = vsel %vm208, %v212, 4
    %215 = vst [vmem:[#allocation1] ss:$2 sm:$0xff] %v213
    %s216 = scalar_lea.vmem [#allocation1], 16
    %217 = vst [vmem:[%s216] ss:$2 sm:$0xff] %v214
    %v218 = vld.sshfl [vmem:[#allocation1] sm:$0xff pattern:$0x75316420]
    %v219 = vld.sshfl [vmem:[#allocation1 + $0x8] sm:$0xff pattern:$0x75316420]
    %v220 = vld.sshfl [vmem:[#allocation1 + $0x10] sm:$0xff pattern:$0x75316420]
    %v221 = vsel %vm62, %v218, 2147483647
    %v222 = vrot.slane %v221, 4
    %vm223 = vcmp.lt.s32.totalorder %v221, %v222
    %v224 = vsel %vm223, %v221, %v222
    %v225 = vrot.slane %v224, 2
    %vm226 = vcmp.lt.s32.totalorder %v224, %v225
    %v227 = vsel %vm226, %v224, %v225
    %v228 = vrot.slane %v227, 1
    %vm229 = vcmp.lt.s32.totalorder %v227, %v228
    %v230 = vsel %vm229, %v227, %v228
    %v231 = vsel %vm62, %v219, 2147483647
    %v232 = vrot.slane %v231, 4
    %vm233 = vcmp.lt.s32.totalorder %v231, %v232
    %v234 = vsel %vm233, %v231, %v232
    %v235 = vrot.slane %v234, 2
    %vm236 = vcmp.lt.s32.totalorder %v234, %v235
    %v237 = vsel %vm236, %v234, %v235
    %v238 = vrot.slane %v237, 1
    %vm239 = vcmp.lt.s32.totalorder %v237, %v238
    %v240 = vsel %vm239, %v237, %v238
    %v241 = vsel %vm62, %v220, 2147483647
    %v242 = vrot.slane %v241, 4
    %vm243 = vcmp.lt.s32.totalorder %v241, %v242
    %v244 = vsel %vm243, %v241, %v242
    %v245 = vrot.slane %v244, 2
    %vm246 = vcmp.lt.s32.totalorder %v244, %v245
    %v247 = vsel %vm246, %v244, %v245
    %v248 = vrot.slane %v247, 1
    %vm249 = vcmp.lt.s32.totalorder %v247, %v248
    %v250 = vsel %vm249, %v247, %v248
    %v251 = vrot.slane %v240, 7
    %v252 = vrot.slane %v250, 6
    %v253 = vsel %vm195, %v230, %v251
    %v254 = vsel %vm199, %v253, %v252
    %255 = vst.msk [vmem:[#allocation7] sm:$0x7] %vm205, %v254
    %vm256 = vcmp.eq.s32.totalorder %v230, %v136
    %vm257 = vcmp.eq.s32.totalorder %v240, %v137
    %vm258 = vcmp.eq.s32.totalorder %v250, %v138
    %v259 = vsel %vm178, 1, 0
    %v260 = vsel %vm179, 1, 0
    %v261 = vperm.slane %v259, 0
    %v262 = vperm.slane %v259, 4
    %v263 = vperm.slane %v260, 0
    %vm264 = vcmp.ne.s32.totalorder %v261, 0
    %vm265 = vcmp.ne.s32.totalorder %v262, 0
    %vm266 = vcmp.ne.s32.totalorder %v263, 0
    %vm267 = vmand %vm256, %vm264
    %vm268 = vmand %vm257, %vm265
    %vm269 = vmand %vm258, %vm266
    %v270 = vsel %vm267, 1, 0
    %v271 = vsel %vm268, 1, 0
    %v272 = vsel %vm269, 1, 0
    %v273 = vrot.slane %v271, 7
    %v274 = vrot.slane %v272, 6
    %v275 = vsel %vm195, %v270, %v273
    %v276 = vsel %vm199, %v275, %v274
    %277 = vst.msk [vmem:[#allocation10] sm:$0x7] %vm205, %v276
    // Predicated region
    $region18: #{tpu_custom_call.1} parent=1 // pred_check
      _
    $region19: #{tpu_custom_call.1} parent=1 // pred_check_branch
      %279 = sbr.rel (0) target = $region21
    $region20: #{tpu_custom_call.1} parent=1 // pred_region
      %281 = vsyncadd [#allocation4], 0
      %s283 = sshll.u32 [#allocation7], 4
      %s284 = int_to_ptr.vmem [resolvable:$true] %s283
      %s285 = sshll.u32 %s2, 4
      %s286 = int_to_ptr.hbm [resolvable:$true] %s285
      %288 = dma.vmem_to_hbm [thread:$0]  %s284, 48, %s286, [#allocation4]
    $region21: #{tpu_custom_call.1} parent=1 // pred_fallthru
      _
    // Predicated region
    $region22: #{tpu_custom_call.1} parent=1 // pred_check
      _
    $region23: #{tpu_custom_call.1} parent=1 // pred_check_branch
      %290 = sbr.rel (0) target = $region25
    $region24: #{tpu_custom_call.1} parent=1 // pred_region
      %292 = vsyncadd [#allocation9], 0
      %s294 = sshll.u32 [#allocation8], 4
      %s295 = int_to_ptr.vmem [resolvable:$true] %s294
      %s296 = sshll.u32 %s3, 4
      %s297 = int_to_ptr.hbm [resolvable:$true] %s296
      %299 = dma.vmem_to_hbm [thread:$0]  %s295, 48, %s297, [#allocation9]
    $region25: #{tpu_custom_call.1} parent=1 // pred_fallthru
      _
    // Predicated region
    $region26: #{tpu_custom_call.1} parent=1 // pred_check
      _
    $region27: #{tpu_custom_call.1} parent=1 // pred_check_branch
      %301 = sbr.rel (0) target = $region29
    $region28: #{tpu_custom_call.1} parent=1 // pred_region
      %303 = vsyncadd [#allocation9], 0
      %s305 = sshll.u32 [#allocation10], 4
      %s306 = int_to_ptr.vmem [resolvable:$true] %s305
      %s307 = sshll.u32 %s4, 4
      %s308 = int_to_ptr.hbm [resolvable:$true] %s307
      %310 = dma.vmem_to_hbm [thread:$0]  %s306, 48, %s308, [#allocation9]
    $region29: #{tpu_custom_call.1} parent=1 // pred_fallthru
      _
    // Predicated region
    $region30: #{tpu_custom_call.1} parent=1 // pred_check
      _
    $region31: #{tpu_custom_call.1} parent=1 // pred_check_branch
      %312 = sbr.rel (0) target = $region33
    $region32: #{tpu_custom_call.1} parent=1 // pred_region
      %314 = dma.done [#allocation4], 48
    $region33: #{tpu_custom_call.1} parent=1 // pred_fallthru
      _
    // Predicated region
    $region34: #{tpu_custom_call.1} parent=1 // pred_check
      _
    $region35: #{tpu_custom_call.1} parent=1 // pred_check_branch
      %316 = sbr.rel (0) target = $region37
    $region36: #{tpu_custom_call.1} parent=1 // pred_region
      %318 = dma.done [#allocation9], 48
    $region37: #{tpu_custom_call.1} parent=1 // pred_fallthru
      _
    // Predicated region
    $region38: #{tpu_custom_call.1} parent=1 // pred_check
      _
    $region39: #{tpu_custom_call.1} parent=1 // pred_check_branch
      %320 = sbr.rel (0) target = $region41
    $region40: #{tpu_custom_call.1} parent=1 // pred_region
      %322 = dma.done [#allocation9], 48
    $region41: #{tpu_custom_call.1} parent=1 // pred_fallthru
      _
    %323 = vsyncpa [#allocation3], 1
    %324 = vsyncpa [#allocation6], 1
    %325 = vsyncpa [#allocation4], 1
    %326 = vsyncpa [#allocation9], 1

</llo_original>
